<compile_context>
chip_gen: v7x
topology: tpu7x:2x2x1
jax: 0.10.0
libtpu: 0.0.40
codegen_flags: <defaults>
</compile_context>

<pallas_src>
import jax
import jax.numpy as jnp
from jax.experimental import pallas as pl
from jax.experimental.pallas import tpu as pltpu


def mask_layer_1d_kernel(p_ref, w_ref, q_ref):
    # p_ref: (B*S, 2S) bf16 packed images [Xr^T | Xi^T], B images stacked along rows.
    # w_ref: (2S, 2S)  bf16 precomputed complex operator in real block form (grid-invariant).
    # q_ref: (B*S, 2S) f32  packed outputs [Yr^T | Yi^T].
    q_ref[...] = jnp.dot(
        p_ref[...], w_ref[...], preferred_element_type=jnp.float32
    ).astype(q_ref.dtype)


def _pick_block_images(n, s):
    # Per-image VMEM footprint of one pipelined slab: bf16 input + f32 output,
    # double-buffered.  Keep the working set under ~10 MiB so it fits v5e's 16 MiB
    # scoped-VMEM default and v7x's 32 MiB default; on v6e (128 MiB VMEM) pass a
    # larger block_images (e.g. 16 at S=256) for deeper MXU fill.
    per_image = s * (2 * s) * (2 + 4) * 2
    b = max(1, (10 * 1024 * 1024) // per_image)
    b = min(b, n)
    # Keep >= 2 grid steps when possible so the batch axis can be megacore-sharded
    # on v7x (harmless no-op on v5e/v6e, which have a single TensorCore).
    if n >= 2 and n // b < 2:
        b = pl.cdiv(n, 2)
    return b


def mask_layer_1d(x, mask, image_size, block_images=None):
    """x: any shape reshapeable to (-1, 1, S, S, 2); mask: (S,) parameter."""
    S = image_size
    x = x.reshape(-1, S, S, 2).astype(jnp.float32)
    N = x.shape[0]

    # ---- Precompute the collapsed operator A = conj(F) @ diag(mask_bin) @ F (wrapper/XLA).
    idx = jnp.arange(S, dtype=jnp.float32)
    ang = (-2.0 * jnp.pi / S) * jnp.outer(idx, idx)
    scale = 1.0 / jnp.sqrt(jnp.float32(S))
    fr = jnp.cos(ang) * scale                       # F real part (symmetric)
    fi = jnp.sin(ang) * scale                       # F imag part (symmetric)
    # Binarize.apply(mask.repeat(1, S), 0.5) forward pass: hard threshold per line.
    mb = (mask.reshape(S, 1).astype(jnp.float32) > 0.5).astype(jnp.float32)
    gr, gi = mb * fr, mb * fi                       # diag(mask_bin) @ F
    ar = fr @ gr + fi @ gi                          # A = (fr - i*fi) @ (gr + i*gi)
    ai = fr @ gi - fi @ gr
    # Real 2Sx2S block matrix so that [Xr^T | Xi^T] @ W = [Yr^T | Yi^T].
    w = jnp.concatenate(
        [jnp.concatenate([ar.T, ai.T], axis=1),
         jnp.concatenate([-ai.T, ar.T], axis=1)],
        axis=0,
    ).astype(jnp.bfloat16)

    # ---- Pack images: P[b, j, c*S + k] = x[b, k, j, c]  (transposed real|imag slabs).
    # bf16 operands feed the MXU at native rate; accumulation stays f32 in-kernel.
    p = jnp.transpose(x, (0, 2, 3, 1)).reshape(N, S, 2 * S).astype(jnp.bfloat16)

    B = block_images if block_images is not None else _pick_block_images(N, S)
    G = pl.cdiv(N, B)
    n_pad = G * B
    if n_pad != N:
        p = jnp.pad(p, ((0, n_pad - N), (0, 0), (0, 0)))
    p = p.reshape(n_pad * S, 2 * S)                 # contiguous row-stack of image slabs

    q = pl.pallas_call(
        mask_layer_1d_kernel,
        out_shape=jax.ShapeDtypeStruct((n_pad * S, 2 * S), jnp.float32),
        grid_spec=pltpu.PrefetchScalarGridSpec(
            num_scalar_prefetch=0,
            grid=(G,),
            in_specs=[
                pl.BlockSpec((B * S, 2 * S), lambda g: (g, 0)),   # packed image block
                pl.BlockSpec((2 * S, 2 * S), lambda g: (0, 0)),   # grid-invariant W
            ],
            out_specs=pl.BlockSpec((B * S, 2 * S), lambda g: (g, 0)),
        ),
        compiler_params=pltpu.CompilerParams(
            dimension_semantics=("parallel",),
        ),
    )(p, w)

    # ---- Unpack to the module's (N, 1, S, S, 2) interleaved-complex layout.
    q = q.reshape(n_pad, S, 2, S)[:N]               # [b, j, c, i]
    out = jnp.transpose(q, (0, 3, 1, 2))            # [b, i, j, c]
    return out[:, None, :, :, :]


if __name__ == "__main__":
    S = 16   # image_size (kept small; module default is 256)
    N = 2    # batch

    key = jax.random.PRNGKey(0)
    kx, km = jax.random.split(key)
    x = jax.random.normal(kx, (N, 1, S, S, 2), dtype=jnp.float32)
    # Deterministic parameter init for self.mask (shape (S,) -> viewed (S, 1)).
    mask = jax.random.uniform(km, (S,), dtype=jnp.float32)

    out = mask_layer_1d(x, mask, S)
    out = jax.block_until_ready(out)

    # Pure-JAX reference: IFFT2( binarized_mask * FFT2(x) ), ortho norm.
    xc = x[:, 0, :, :, 0] + 1j * x[:, 0, :, :, 1]
    mb = (mask.reshape(S, 1) > 0.5).astype(jnp.float32)
    ref = jnp.fft.ifft2(jnp.fft.fft2(xc, norm="ortho") * mb, norm="ortho")

    assert out.shape == (N, 1, S, S, 2), out.shape
    # bf16 MXU operands with f32 accumulation: slightly looser tolerance than pure f32.
    assert jnp.allclose(out[:, 0, :, :, 0], ref.real, rtol=2e-2, atol=2e-2)
    assert jnp.allclose(out[:, 0, :, :, 1], ref.imag, rtol=2e-2, atol=2e-2)

    print("KERNEL_OK")
</pallas_src>

<mosaic_0001>
module attributes {stable_mosaic.version = 11 : i64} {
  func.func @mask_layer_1d_kernel(%arg0: i32, %arg1: memref<16x32xbf16, #tpu.memory_space<vmem>>, %arg2: memref<32x32xbf16, #tpu.memory_space<vmem>>, %arg3: memref<16x32xf32, #tpu.memory_space<vmem>>) attributes {dimension_semantics = [#tpu.dimension_semantics<parallel>], iteration_bounds = array<i64: 2>, scalar_prefetch = 0 : i64, scratch_operands = 0 : i64, tpu.core_type = #tpu.core_type<tc>, window_params = [{transform_indices = @transform_0, window_bounds = array<i64: 16, 32>}, {pipeline_mode = #tpu.pipeline_mode<synchronous>, transform_indices = @transform_1, window_bounds = array<i64: 32, 32>}, {transform_indices = @transform_2, window_bounds = array<i64: 16, 32>}]} {
    %c0 = arith.constant 0 : index
    %c0_0 = arith.constant 0 : index
    %0 = vector.load %arg1[%c0, %c0_0] : memref<16x32xbf16, #tpu.memory_space<vmem>>, vector<16x32xbf16>
    %c0_1 = arith.constant 0 : index
    %c0_2 = arith.constant 0 : index
    %1 = vector.load %arg2[%c0_1, %c0_2] : memref<32x32xbf16, #tpu.memory_space<vmem>>, vector<32x32xbf16>
    %cst = arith.constant dense<0.000000e+00> : vector<16x32xf32>
    %2 = tpu.matmul %0, %1, %cst {dimension_numbers = #tpu.dot_dimension_numbers<[1], [0], [0], [1], [0, 0, 1, 1], [], []>} : vector<16x32xbf16>, vector<32x32xbf16>, vector<16x32xf32> -> vector<16x32xf32>
    %c0_3 = arith.constant 0 : index
    %c0_4 = arith.constant 0 : index
    %3 = vector.load %arg3[%c0_3, %c0_4] : memref<16x32xf32, #tpu.memory_space<vmem>>, vector<16x32xf32>
    tpu.vector_store %arg3[%c0_3, %c0_4], %2 {strides = array<i32>} : memref<16x32xf32, #tpu.memory_space<vmem>>, vector<16x32xf32>,
    return
  }
  func.func @transform_0(%arg0: i32) -> (i32, i32) {
    %c0_i32 = arith.constant 0 : i32
    %c0_i32_0 = arith.constant 0 : i32
    return %arg0, %c0_i32 : i32, i32
  }
  func.func @transform_1(%arg0: i32) -> (i32, i32) {
    %c0_i32 = arith.constant 0 : i32
    %c0_i32_0 = arith.constant 0 : i32
    %c0_i32_1 = arith.constant 0 : i32
    return %c0_i32, %c0_i32_0 : i32, i32
  }
  func.func @transform_2(%arg0: i32) -> (i32, i32) {
    %c0_i32 = arith.constant 0 : i32
    %c0_i32_0 = arith.constant 0 : i32
    return %arg0, %c0_i32 : i32, i32
  }
}

</mosaic_0001>

<llo_original>
// kernel: tpu_custom_call.1
$region0: #{tpu_custom_call.1}
  #allocation0 [shape = 'u32[]', space=smem, size = 0x4, offset = 0x4, fixed_abs, tag = 'smem constant byte address 0x4 - core index']
  #allocation1 [shape = 'u32[144,128]{1,0:T(1,128)}', space=vmem, size = 0x12000, scoped, tag = 'internal scratch']
  %s0 = inlined_call_operand.hbm [shape: bf16[32,32], index: 0, kind: input, shape index: {}]
  %s1 = inlined_call_operand.hbm [shape: bf16[32,32], index: 1, kind: input, shape index: {}]
  %s2 = inlined_call_operand.hbm [shape: f32[32,32], index: 2, kind: output, shape index: {}]
  %s3 = sld [smem:[#allocation0]]
  $region49: #{tpu_custom_call.1} parent=0
    _
  %s5 = ssub.s32 1, %s3
  %s6 = scalar_select 0, %s5, %s3
  $region1: #{tpu_custom_call.1} parent=0
    #allocation2 [shape = 'u8[8192]{0}', space=vmem, size = 0x2000, scoped, tag = 'input window, operand 0']
    #allocation3 [shape = 's32[2]{0}', space=sflag, size = 0x8, scoped, tag = 'scoped memory for tpu_custom_call.1']
    #allocation4 [shape = 's32[2]{0}', space=sflag, size = 0x8, scoped, tag = 'scoped memory for tpu_custom_call.1']
    #allocation5 [shape = 'u8[8192]{0}', space=vmem, size = 0x2000, scoped, tag = 'input window, operand 1, single buffered']
    #allocation6 [shape = 's32[1]{0}', space=sflag, size = 0x4, scoped, tag = 'scoped memory for tpu_custom_call.1']
    #allocation7 [shape = 'u8[16384]{0}', space=vmem, size = 0x4000, scoped, tag = 'output window, operand 0']
    %7 = vsyncpa [#allocation3], 0
    %s8 = scalar_lea.sflag [#allocation3], 1
    %9 = vsyncpa %s8, 0
    %10 = vsyncpa [#allocation6], 0
    %11 = vsyncpa [#allocation4], 0
    %s12 = scalar_lea.sflag [#allocation4], 1
    %13 = vsyncpa %s12, 0
    loop: start=0, step=1, limit=4
    $region2: #{tpu_custom_call.1} parent=1 // loop_pre_header
      _
    $region3: #{tpu_custom_call.1} parent=1 // loop_header
      %s15 = sphi 0, %s19
      %p16 = scmp.ge.s32.totalorder %s15, 4
      %s25 = sphi 0, %s27
      %s28 = sphi 0, %s25
      %s29 = sphi 0, %s28
      %s45 = sphi 0, %s29
      %s49 = sphi 0, %s49
      %s51 = sphi 0, %s49
      %s52 = sphi 0, %s51
      %s66 = sphi 0, %s52
      %s72 = sphi 0, %s74
      %s75 = sphi 0, %s72
      %s76 = sphi 0, %s75
      %s92 = sphi 0, %s76
    $region4: #{tpu_custom_call.1} parent=1 // loop_header_branch
      %18 = sbr.rel (%p16) target = $region8
    $region5: #{tpu_custom_call.1} parent=1 // loop_body
      %s20 = ssub.s32 %s15, 1
      %s21 = ssub.s32 %s15, 2
      %s22 = sadd.s32 %s15, 1
      %s23 = ssub.s32 %s15, %s22
      %p24 = scmp.eq.s32.totalorder %s23, 0
      %s26 = sadd.s32 %s25, 1
      %s27 = scalar_select %p24, %s25, %s26
      %p30 = pneg %p24
      %p31 = scmp.eq.s32.totalorder %s15, 1
      %p32 = por %p30, %p31
      %p33 = scmp.ne.s32.totalorder %s25, %s28
      %p34 = scmp.eq.s32.totalorder %s15, 0
      %p35 = por %p33, %p34
      %p36 = scmp.ne.s32.totalorder %s25, %s28
      %p37 = scmp.eq.s32.totalorder %s20, 1
      %p38 = por %p36, %p37
      %p39 = scmp.ne.s32.totalorder %s28, %s29
      %p40 = scmp.eq.s32.totalorder %s20, 0
      %p41 = por %p39, %p40
      %p42 = scmp.ne.s32.totalorder %s28, %s29
      %p43 = scmp.eq.s32.totalorder %s21, 1
      %p44 = por %p42, %p43
      %p46 = scmp.ne.s32.totalorder %s29, %s45
      %p47 = scmp.eq.s32.totalorder %s21, 0
      %p48 = por %p46, %p47
      %s50 = sadd.s32 %s49, 1
      %p53 = scmp.eq.s32.totalorder %s15, 1
      %p54 = scmp.ne.s32.totalorder %s49, %s51
      %p55 = scmp.eq.s32.totalorder %s15, 0
      %p56 = por %p54, %p55
      %p57 = scmp.ne.s32.totalorder %s49, %s51
      %p58 = scmp.eq.s32.totalorder %s20, 1
      %p59 = por %p57, %p58
      %p60 = scmp.ne.s32.totalorder %s51, %s52
      %p61 = scmp.eq.s32.totalorder %s20, 0
      %p62 = por %p60, %p61
      %p63 = scmp.ne.s32.totalorder %s51, %s52
      %p64 = scmp.eq.s32.totalorder %s21, 1
      %p65 = por %p63, %p64
      %p67 = scmp.ne.s32.totalorder %s52, %s66
      %p68 = scmp.eq.s32.totalorder %s21, 0
      %p69 = por %p67, %p68
      %s70 = ssub.s32 %s15, %s22
      %p71 = scmp.eq.s32.totalorder %s70, 0
      %s73 = sadd.s32 %s72, 1
      %s74 = scalar_select %p71, %s72, %s73
      %p77 = pneg %p71
      %p78 = scmp.eq.s32.totalorder %s15, 1
      %p79 = por %p77, %p78
      %p80 = scmp.ne.s32.totalorder %s72, %s75
      %p81 = scmp.eq.s32.totalorder %s15, 0
      %p82 = por %p80, %p81
      %p83 = scmp.ne.s32.totalorder %s72, %s75
      %p84 = scmp.eq.s32.totalorder %s20, 1
      %p85 = por %p83, %p84
      %p86 = scmp.ne.s32.totalorder %s75, %s76
      %p87 = scmp.eq.s32.totalorder %s20, 0
      %p88 = por %p86, %p87
      %p89 = scmp.ne.s32.totalorder %s75, %s76
      %p90 = scmp.eq.s32.totalorder %s21, 1
      %p91 = por %p89, %p90
      %p93 = scmp.ne.s32.totalorder %s76, %s92
      %p94 = scmp.eq.s32.totalorder %s21, 0
      %p95 = por %p93, %p94
      %p96 = scmp.le.s32.totalorder 1, %s15
      %p97 = scmp.lt.s32.totalorder %s15, 3
      %p98 = pnand %p96, %p97
      %p99 = pneg %p98
      // Predicated region
      $region9: #{tpu_custom_call.1} parent=5 // pred_check
        _
      $region10: #{tpu_custom_call.1} parent=5 // pred_check_branch
        %101 = sbr.rel (%p98) target = $region12
      $region11: #{tpu_custom_call.1} parent=5 // pred_region
        %s102 = ssub.s32 %s15, 1
        // Predicated region
        $region13: #{tpu_custom_call.1} parent=11 // pred_check
          %p103 = pneg %p62
        $region14: #{tpu_custom_call.1} parent=11 // pred_check_branch
          %105 = sbr.rel (%p103) target = $region16
        $region15: #{tpu_custom_call.1} parent=11 // pred_region
          %s107 = ssub.s32 256, 256
          %108 = vsyncadd [#allocation6], %s107
          %s109 = sshll.u32 [#allocation5], 4
          %s110 = int_to_ptr.vmem [resolvable:$true] %s109
          %115 = dma.hbm_to_vmem [thread:$0]  %s1, 256, %s110, [#allocation6], 64, 64, 4
        $region16: #{tpu_custom_call.1} parent=11 // pred_fallthru
          _
      $region12: #{tpu_custom_call.1} parent=5 // pred_fallthru
        _
      %p116 = scmp.lt.s32.totalorder %s15, 2
      // Predicated region
      $region17: #{tpu_custom_call.1} parent=5 // pred_check
        %p117 = pneg %p116
      $region18: #{tpu_custom_call.1} parent=5 // pred_check_branch
        %119 = sbr.rel (%p117) target = $region20
      $region19: #{tpu_custom_call.1} parent=5 // pred_region
        // Predicated region
        $region21: #{tpu_custom_call.1} parent=19 // pred_check
          %p120 = pneg %p35
        $region22: #{tpu_custom_call.1} parent=19 // pred_check_branch
          %122 = sbr.rel (%p120) target = $region24
        $region23: #{tpu_custom_call.1} parent=19 // pred_region
          %s123 = sand.u32 %s25, 1
          %s124 = scalar_lea.sflag [#allocation3], %s123
          %s125 = sand.u32 %s25, 1
          %s126 = smul.addr %s125, 8
          %s127 = scalar_lea.vmem [#allocation2], %s126
          %s128 = smul.u32 2, %s15
          %s130 = ssub.s32 128, 128
          %131 = vsyncadd %s124, %s130
          %s132 = smul.addr %s128, 64
          %s133 = scalar_lea.hbm %s0, %s132
          %s134 = sshll.u32 %s127, 4
          %s135 = int_to_ptr.vmem [resolvable:$true] %s134
          %140 = dma.hbm_to_vmem [thread:$0]  %s133, 128, %s135, %s124, 64, 64, 4
        $region24: #{tpu_custom_call.1} parent=19 // pred_fallthru
          _
      $region20: #{tpu_custom_call.1} parent=5 // pred_fallthru
        _
      %p141 = scmp.le.s32.totalorder 1, %s15
      %p142 = scmp.lt.s32.totalorder %s15, 3
      %p143 = pnand %p141, %p142
      %p144 = pneg %p143
      // Predicated region
      $region25: #{tpu_custom_call.1} parent=5 // pred_check
        _
      $region26: #{tpu_custom_call.1} parent=5 // pred_check_branch
        %146 = sbr.rel (%p143) target = $region28
      $region27: #{tpu_custom_call.1} parent=5 // pred_region
        %s147 = ssub.s32 %s15, 1
        %s148 = sand.u32 %s28, 1
        %s149 = scalar_lea.sflag [#allocation3], %s148
        %s150 = sand.u32 %s28, 1
        %s151 = smul.addr %s150, 8
        %s152 = scalar_lea.vmem [#allocation2], %s151
        // Predicated region
        $region29: #{tpu_custom_call.1} parent=27 // pred_check
          %p153 = pneg %p41
        $region30: #{tpu_custom_call.1} parent=27 // pred_check_branch
          %155 = sbr.rel (%p153) target = $region32
        $region31: #{tpu_custom_call.1} parent=27 // pred_region
          %156 = dma.done %s149, 128
        $region32: #{tpu_custom_call.1} parent=27 // pred_fallthru
          _
        // Predicated region
        $region33: #{tpu_custom_call.1} parent=27 // pred_check
          %p157 = pneg %p62
        $region34: #{tpu_custom_call.1} parent=27 // pred_check_branch
          %159 = sbr.rel (%p157) target = $region36
        $region35: #{tpu_custom_call.1} parent=27 // pred_region
          %160 = dma.done [#allocation6], 256
        $region36: #{tpu_custom_call.1} parent=27 // pred_fallthru
          _
        %s161 = sand.u32 %s28, 1
        %s162 = scalar_lea.sflag [#allocation3], %s161
        %s163 = sand.u32 %s28, 1
        %s164 = smul.addr %s163, 8
        %s165 = scalar_lea.vmem [#allocation2], %s164
        %p166 = pneg %p41
        %p167 = pneg %p38
        %p168 = pneg %p62
        %p169 = pneg %p59
        %p170 = pneg %p88
        %p171 = pneg %p85
        %s172 = sand.u32 %s75, 1
        %s173 = scalar_lea.sflag [#allocation4], %s172
        %s174 = sand.u32 %s75, 1
        %s175 = smul.addr %s174, 16
        %s176 = scalar_lea.vmem [#allocation7], %s175
        %s177 = smul.u32 2, %s20
        %s178 = smul.u32 2, %s20
        %v180 = vld [vmem:[%s152] sm:$0xf]
        %v181 = vld [vmem:[%s152 + $0x4] sm:$0xf]
        %v182 = vld [vmem:[#allocation5] sm:$0xf]
        %v183 = vld [vmem:[#allocation5 + $0x4] sm:$0xf]
        %v184 = vld [vmem:[#allocation5 + $0x8] sm:$0xf]
        %v185 = vld [vmem:[#allocation5 + $0xc] sm:$0xf]
        %v188 = vunpack.c.l.b16 %v180
        %v189 = vunpack.c.l.b16 %v181
        %v190 = vpack.c.b16 %v189, %v188
        %v195 = vunpack.c.l.b16 %v182
        %v196 = vunpack.c.l.b16 %v183
        %v197 = vunpack.c.l.b16 %v184
        %v198 = vunpack.c.l.b16 %v185
        %v199 = vpack.c.b16 %v196, %v195
        %v200 = vpack.c.b16 %v198, %v197
        %vm203 = vcmask 261120
        %v205 = vsel %vm203, %v190, 0
        %207 = vmatprep.subr.bf16.mxu0 0
        %208 = vmatpush1.bf16.msra.mxu0 %v199
        %209 = vmatprep.subr.bf16.mxu0 0
        %210 = vmatpush1.bf16.msra.mxu0 %v200
        %211 = vmatprep.subr.bf16.mxu0 0
        %212 = vmatpush1.bf16.msra.mxu0 0
        %213 = vmatprep.subr.bf16.mxu0 0
        %214 = vmatpush1.bf16.msra.mxu0 0
        %215 = vmatprep.subr.bf16.mxu0 0
        %216 = vmatpush1.bf16.msra.mxu0 0
        %217 = vmatprep.subr.bf16.mxu0 0
        %218 = vmatpush1.bf16.msra.mxu0 0
        %219 = vmatprep.subr.bf16.mxu0 0
        %220 = vmatpush1.bf16.msra.mxu0 0
        %221 = vmatprep.subr.bf16.mxu0 0
        %222 = vmatpush1.bf16.msra.mxu0 0
        %223 = vmatprep.subr.bf16.mxu0 0
        %224 = vmatpush1.bf16.msra.mxu0 0
        %225 = vmatprep.subr.bf16.mxu0 0
        %226 = vmatpush1.bf16.msra.mxu0 0
        %227 = vmatprep.subr.bf16.mxu0 0
        %228 = vmatpush1.bf16.msra.mxu0 0
        %229 = vmatprep.subr.bf16.mxu0 0
        %230 = vmatpush1.bf16.msra.mxu0 0
        %231 = vmatprep.subr.bf16.mxu0 0
        %232 = vmatpush1.bf16.msra.mxu0 0
        %233 = vmatprep.subr.bf16.mxu0 0
        %234 = vmatpush1.bf16.msra.mxu0 0
        %235 = vmatprep.subr.bf16.mxu0 0
        %236 = vmatpush1.bf16.msra.mxu0 0
        %237 = vmatprep.subr.bf16.mxu0 0
        %238 = vmatpush1.bf16.msra.mxu0 0
        %239 = vmatprep.mubr.bf16.mxu0 0
        %240 = vmatmul.mubr.bf16.gmra.mrb[0].mxu0 %v205
        %v241 = vpop.f32.mrb[0].mxu0
        %v242 = vadd.f32 0.0, %v241
        %v243 = vpop.f32.mrb[0].mxu0
        %v244 = vpop.f32.mrb[0].mxu0
        %v245 = vadd.f32 0.0, %v244
        %v246 = vpop.f32.mrb[0].mxu0
        %247 = vdwg.mxu0
        %248 = vst.msk [vmem:[%s176] sm:$0xff] %vm203, %v242
        %249 = vst.msk [vmem:[%s176 + $0x8] sm:$0xff] %vm203, %v245
        %s250 = sand.u32 %s75, 1
        %s251 = scalar_lea.sflag [#allocation4], %s250
        %s252 = sand.u32 %s75, 1
        %s253 = smul.addr %s252, 16
        %s254 = scalar_lea.vmem [#allocation7], %s253
        // Predicated region
        $region37: #{tpu_custom_call.1} parent=27 // pred_check
          %p255 = pneg %p85
        $region38: #{tpu_custom_call.1} parent=27 // pred_check_branch
          %257 = sbr.rel (%p255) target = $region40
        $region39: #{tpu_custom_call.1} parent=27 // pred_region
          %s258 = smul.u32 2, %s20
          %s260 = ssub.s32 256, 256
          %261 = vsyncadd %s251, %s260
          %s262 = smul.addr %s258, 128
          %s263 = scalar_lea.hbm %s2, %s262
          %s264 = sshll.u32 %s254, 4
          %s265 = int_to_ptr.vmem [resolvable:$true] %s264
          %270 = dma.vmem_to_hbm [thread:$0]  %s265, 256, %s263, %s251, 128, 128, 8
        $region40: #{tpu_custom_call.1} parent=27 // pred_fallthru
          _
      $region28: #{tpu_custom_call.1} parent=5 // pred_fallthru
        _
      %p271 = scmp.le.s32.totalorder 2, %s15
      // Predicated region
      $region41: #{tpu_custom_call.1} parent=5 // pred_check
        %p272 = pneg %p271
      $region42: #{tpu_custom_call.1} parent=5 // pred_check_branch
        %274 = sbr.rel (%p272) target = $region44
      $region43: #{tpu_custom_call.1} parent=5 // pred_region
        %s275 = ssub.s32 %s15, 2
        // Predicated region
        $region45: #{tpu_custom_call.1} parent=43 // pred_check
          %p276 = pneg %p91
        $region46: #{tpu_custom_call.1} parent=43 // pred_check_branch
          %278 = sbr.rel (%p276) target = $region48
        $region47: #{tpu_custom_call.1} parent=43 // pred_region
          %s279 = sand.u32 %s76, 1
          %s280 = scalar_lea.sflag [#allocation4], %s279
          %s281 = sand.u32 %s76, 1
          %s282 = smul.addr %s281, 16
          %s283 = scalar_lea.vmem [#allocation7], %s282
          %284 = dma.done %s280, 256
        $region48: #{tpu_custom_call.1} parent=43 // pred_fallthru
          _
      $region44: #{tpu_custom_call.1} parent=5 // pred_fallthru
        _
    $region6: #{tpu_custom_call.1} parent=1 // loop_footer
      %s19 = sadd.s32 1, %s15
    $region7: #{tpu_custom_call.1} parent=1 // loop_footer_branch
      %14 = sbr.rel target = $region3
    $region8: #{tpu_custom_call.1} parent=1 // loop_exit
      _
    %285 = vsyncpa [#allocation3], 1
    %s286 = scalar_lea.sflag [#allocation3], 1
    %287 = vsyncpa %s286, 1
    %288 = vsyncpa [#allocation6], 1
    %289 = vsyncpa [#allocation4], 1
    %s290 = scalar_lea.sflag [#allocation4], 1
    %291 = vsyncpa %s290, 1

</llo_original>
